<compile_context>
chip_gen: v7x
topology: tpu7x:2x2x1
jax: 0.10.0
libtpu: 0.0.40
codegen_flags: <defaults>
</compile_context>

<pallas_src>
import functools

import numpy as np
import jax
import jax.numpy as jnp
from jax.experimental import pallas as pl
from jax.experimental.pallas import tpu as pltpu


# ------------------------------- tiling helpers -----------------------------

_TARGET_LOGITS_BLOCK_BYTES = 2 * 1024 * 1024   # ~2 MiB of logits per grid step


def _round_up(x, m):
    return ((x + m - 1) // m) * m


def _pick_th(h, c, w, target_bytes=_TARGET_LOGITS_BLOCK_BYTES):
    """Image rows per grid step (multiple of 8 sublanes).

    Sized so the (1, C, TH, W) logits block is ~2 MiB; with double-buffered
    in/out blocks plus the in-kernel f32 temporaries this stays inside the
    32 MiB scoped-VMEM limit requested below on every generation (v5e/v6e have
    128 MiB physical VMEM, v7x 64 MiB).  Lower target_bytes for extreme C*W.
    """
    rows = max(1, target_bytes // max(1, c * w * 4))
    th = max(8, (rows // 8) * 8)
    return min(th, _round_up(h, 8))


# ------------------ scipy.ndimage.zoom replicas (static, NumPy) -------------


def _zoom_out_size(in_s, zoom):
    return int(round(in_s * zoom))


def _zoom_coords(in_s, out_s):
    if out_s > 1:
        return np.arange(out_s) * ((in_s - 1) / (out_s - 1))
    return np.zeros((1,))


def _linear_interp_matrix(in_s, out_s, rows=None):
    """(rows, out_s) f32 matrix M with  x @ M == order-1 zoom along that axis
    (scipy.ndimage.zoom grid_mode=False, zoom <= 1).  rows >= in_s zero-pads so
    padded inputs contribute nothing."""
    rows = in_s if rows is None else rows
    coords = _zoom_coords(in_s, out_s)
    lo = np.floor(coords).astype(np.int64)
    hi = np.minimum(lo + 1, in_s - 1)
    frac = coords - lo
    m = np.zeros((rows, out_s), dtype=np.float64)
    m[lo, np.arange(out_s)] += 1.0 - frac
    m[hi, np.arange(out_s)] += frac
    return m.astype(np.float32)


def _nearest_idx(in_s, out_s):
    """Order-0 zoom sample indices (scipy.ndimage.zoom grid_mode=False)."""
    return np.floor(_zoom_coords(in_s, out_s) + 0.5).astype(np.int32)


# ----------------------------- Pallas kernels ------------------------------


def _stats_kernel(x_ref, t_ref, wmat_ref, pt_ref, lk_ref, ln_ref, pwds_ref):
    """Per (image, row-tile) block.

    x_ref    : (1, C, TH, W)        logits (any float dtype, cast to f32)
    t_ref    : (1, TH, W)           int32 targets (-1 = padded row)
    wmat_ref : (W, WDS_PAD)         static bilinear W-downsample matrix
    pt_ref   : (1, TH, W)           softmax prob of the target class
    lk_ref   : (1, TH, W)           NLL if kept   (lse - logit[target])
    ln_ref   : (1, TH, W)           NLL if dropped (lse - logit[0])
    pwds_ref : (1, C, TH, WDS_PAD)  W-downsampled softmax probs
    """
    c = x_ref.shape[1]
    th, w = x_ref.shape[2], x_ref.shape[3]

    x = x_ref[...].astype(jnp.float32)                       # (1, C, TH, W)
    t = t_ref[...]                                           # (1, TH, W)

    # softmax statistics, vectorized over the (leading) class axis
    m = jnp.max(x, axis=1)                                   # (1, TH, W)
    e = jnp.exp(x - m[:, None, :, :])                        # (1, C, TH, W)
    s = jnp.sum(e, axis=1)                                   # (1, TH, W)
    inv_s = 1.0 / s                                          # one divide/pixel
    lse = m + jnp.log(s)

    # target-class logit via a short select fold (C-1 lane-dense selects);
    # padded rows (t == -1) match nothing -> class-0 logit (masked below).
    logit_t = x[:, 0]
    for k in range(1, c):
        logit_t = jnp.where(t == k, x[:, k], logit_t)
    prob_t = jnp.exp(logit_t - m) * inv_s                    # == softmax[target]

    pad_ok = (t >= 0).astype(jnp.float32)                    # zero padded rows
    pt_ref[...] = prob_t
    lk_ref[...] = (lse - logit_t) * pad_ok
    ln_ref[...] = (lse - x[:, 0]) * pad_ok

    # W-axis bilinear downsample of the full C-channel prob map on the MXU;
    # the full-resolution prob map never leaves VMEM.
    probs = e * inv_s[:, None, :, :]                         # (1, C, TH, W)
    pw = jnp.dot(probs.reshape(c * th, w), wmat_ref[...],
                 preferred_element_type=jnp.float32)         # (C*TH, WDS_PAD)
    pwds_ref[...] = pw.reshape(1, c, th, pwds_ref.shape[3])


def _ohem_loss_kernel(thr_ref, pt_ref, lk_ref, ln_ref, out_ref):
    """thr_ref: SMEM (1,) f32 OHEM threshold (scalar prefetch).
    pt/lk/ln : (1, TH, W) planes from kernel 1.
    out_ref  : (1, 1, 8, W) per-tile partial loss sums."""
    thr = thr_ref[0]
    kept = pt_ref[...] <= thr
    # class-0 pixels have lk == ln and padded pixels have lk == ln == 0, so no
    # extra validity test is needed: the branch only matters for valid pixels.
    loss = jnp.where(kept, lk_ref[...], ln_ref[...])         # (1, TH, W)
    th, w = loss.shape[1], loss.shape[2]
    psum = jnp.sum(loss.reshape(1, th // 8, 8, w), axis=1)   # (1, 8, W)
    out_ref[...] = psum[:, None, :, :]


def _stats_pallas(x, t, wmat, th):
    n, c, h_pad, w = x.shape
    wds_pad = wmat.shape[1]
    n_h_tiles = h_pad // th
    return pl.pallas_call(
        _stats_kernel,
        out_shape=(
            jax.ShapeDtypeStruct((n, h_pad, w), jnp.float32),
            jax.ShapeDtypeStruct((n, h_pad, w), jnp.float32),
            jax.ShapeDtypeStruct((n, h_pad, w), jnp.float32),
            jax.ShapeDtypeStruct((n, c, h_pad, wds_pad), jnp.float32),
        ),
        grid=(n, n_h_tiles),
        in_specs=[
            pl.BlockSpec((1, c, th, w), lambda b, i: (b, 0, i, 0)),
            pl.BlockSpec((1, th, w), lambda b, i: (b, i, 0)),
            pl.BlockSpec((w, wds_pad), lambda b, i: (0, 0)),
        ],
        out_specs=(
            pl.BlockSpec((1, th, w), lambda b, i: (b, i, 0)),
            pl.BlockSpec((1, th, w), lambda b, i: (b, i, 0)),
            pl.BlockSpec((1, th, w), lambda b, i: (b, i, 0)),
            pl.BlockSpec((1, c, th, wds_pad), lambda b, i: (b, 0, i, 0)),
        ),
        compiler_params=pltpu.CompilerParams(
            dimension_semantics=("parallel", "parallel"),
            vmem_limit_bytes=32 * 1024 * 1024,
        ),
    )(x, t, wmat)


def _ohem_loss_pallas(threshold, pt, lk, ln, th):
    n, h_pad, w = pt.shape
    n_h_tiles = h_pad // th
    thr = jnp.reshape(threshold, (1,)).astype(jnp.float32)
    return pl.pallas_call(
        _ohem_loss_kernel,
        out_shape=jax.ShapeDtypeStruct((n, n_h_tiles, 8, w), jnp.float32),
        grid_spec=pltpu.PrefetchScalarGridSpec(
            num_scalar_prefetch=1,
            grid=(n, n_h_tiles),
            in_specs=[
                pl.BlockSpec((1, th, w), lambda b, i, thr_ref: (b, i, 0)),
                pl.BlockSpec((1, th, w), lambda b, i, thr_ref: (b, i, 0)),
                pl.BlockSpec((1, th, w), lambda b, i, thr_ref: (b, i, 0)),
            ],
            out_specs=pl.BlockSpec((1, 1, 8, w),
                                   lambda b, i, thr_ref: (b, i, 0, 0)),
        ),
        compiler_params=pltpu.CompilerParams(
            dimension_semantics=("parallel", "parallel"),
            vmem_limit_bytes=32 * 1024 * 1024,
        ),
    )(thr, pt, lk, ln)


# --------------------------- jitted forward pass ----------------------------


def _ohem_forward(predict, target, *, thresh, min_kept, factor):
    n, c, h, w = predict.shape
    p_total = n * h * w

    # static (trace-time) tiling / interpolation constants
    th = _pick_th(h, c, w)
    h_pad = _round_up(h, th)
    h_ds = _zoom_out_size(h, 1.0 / factor)
    w_ds = _zoom_out_size(w, 1.0 / factor)
    wds_pad = _round_up(w_ds, 128)          # lane-dense, MXU-aligned output
    min_kept_ds = min_kept // (factor * factor)

    wmat_np = np.zeros((w, wds_pad), dtype=np.float32)
    wmat_np[:, :w_ds] = _linear_interp_matrix(w, w_ds)
    wmat = jnp.asarray(wmat_np)
    hmat = jnp.asarray(_linear_interp_matrix(h, h_ds, rows=h_pad))  # (h_pad,h_ds)
    idx_h = jnp.asarray(_nearest_idx(h, h_ds))
    idx_w = jnp.asarray(_nearest_idx(w, w_ds))

    # native NCHW layout; only a small H pad (no transposes).  bf16 logits are
    # accepted as-is (kernel casts to f32 internally).
    x = predict
    t = target.astype(jnp.int32)
    if h_pad != h:
        x = jnp.pad(x, ((0, 0), (0, 0), (0, h_pad - h), (0, 0)))
        t = jnp.pad(t, ((0, 0), (0, h_pad - h), (0, 0)), constant_values=-1)

    # kernel 1: softmax stats + W-downsampled probs (full-res probs never hit HBM)
    pt, lk, ln, pwds = _stats_pallas(x, t, wmat, th)

    # tiny on-device finish of the bilinear downsample (H axis)
    probs_ds = jnp.einsum('nchw,hg->ncgw', pwds[..., :w_ds], hmat,
                          precision=jax.lax.Precision.HIGHEST)    # (n,c,h_ds,w_ds)
    target_ds = jnp.take(jnp.take(target.astype(jnp.int32), idx_h, axis=1),
                         idx_w, axis=2)                           # (n,h_ds,w_ds)

    # on-device OHEM threshold (replicates find_threshold; valid = label != 0)
    valid_ds = target_ds != 0
    num_valid = jnp.sum(valid_ds.astype(jnp.int32))
    pred_ds = jnp.take_along_axis(probs_ds, target_ds[:, None, :, :], axis=1)[:, 0]
    pred_sorted = jnp.sort(jnp.where(valid_ds, pred_ds, jnp.inf).reshape(-1))

    inner = jnp.float32(thresh)
    if min_kept_ds > 0:
        k_th = min(min_kept_ds, int(pred_sorted.shape[0])) - 1    # static index
        new_threshold = pred_sorted[k_th]
        inner = jnp.where(new_threshold > thresh, new_threshold, inner)
    threshold = jnp.where(num_valid > min_kept_ds, inner, jnp.float32(1.0))

    # kernel 2: threshold + cross-entropy partial sums; final mean over n*h*w
    partials = _ohem_loss_pallas(threshold, pt, lk, ln, th)
    return jnp.sum(partials) / jnp.float32(p_total)


# ------------------------------ module wrapper ------------------------------


class OhemCrossEntropy2d:
    """JAX/Pallas port of u2pl OhemCrossEntropy2d (no learnable parameters)."""

    def __init__(self, thresh=0.7, min_kept=100000, factor=8):
        self.thresh = float(thresh)
        self.min_kept = int(min_kept)
        self.factor = int(factor)
        self._fwd = jax.jit(functools.partial(
            _ohem_forward, thresh=self.thresh, min_kept=self.min_kept,
            factor=self.factor))

    def __call__(self, predict, target, weight=None):
        # TODO(synk): the optional `weight` argument is unused by the reference
        # forward (nn.CrossEntropyLoss() is built without it); not implemented.
        return self._fwd(predict, target)


# ------------------------------ pure reference ------------------------------


def _zoom_numpy(arr, zoom_factors, order):
    """NumPy (f64) replica of scipy.ndimage.zoom (grid_mode=False) for zoom <= 1."""
    out_shape = tuple(int(round(s * z)) for s, z in zip(arr.shape, zoom_factors))
    out = arr.astype(np.float64) if order == 1 else arr
    for ax, (in_s, out_s) in enumerate(zip(arr.shape, out_shape)):
        if out_s == in_s:
            continue
        coords = _zoom_coords(in_s, out_s)
        if order == 0:
            idx = np.floor(coords + 0.5).astype(np.int64)
            out = np.take(out, idx, axis=ax)
        else:
            lo = np.floor(coords).astype(np.int64)
            hi = np.minimum(lo + 1, in_s - 1)
            frac = coords - lo
            a = np.take(out, lo, axis=ax)
            b = np.take(out, hi, axis=ax)
            shape = [1] * out.ndim
            shape[ax] = out_s
            frac = frac.reshape(shape)
            out = a * (1.0 - frac) + b * frac
    return out


def _select_threshold(input_prob, input_label, thresh, min_kept_ds):
    valid_flag = input_label != 0          # intended boolean validity mask
    label = input_label[valid_flag]
    num_valid = int(valid_flag.sum())
    threshold = 1.0
    if min_kept_ds >= num_valid:
        threshold = 1.0
    elif num_valid > 0:
        prob = input_prob[:, valid_flag]
        pred = prob[label, np.arange(len(label), dtype=np.int32)]
        threshold = float(thresh)
        if min_kept_ds > 0:
            k_th = min(len(pred), min_kept_ds) - 1
            new_threshold = np.partition(pred, k_th)[k_th]
            if new_threshold > thresh:
                threshold = float(new_threshold)
    return float(threshold)


def find_threshold_reference(np_predict, np_target, thresh, min_kept, factor):
    predict = _zoom_numpy(np_predict, (1.0, 1.0, 1.0 / factor, 1.0 / factor), order=1)
    target = _zoom_numpy(np_target, (1.0, 1.0 / factor, 1.0 / factor), order=0)
    n, c, hh, ww = predict.shape
    min_kept_ds = min_kept // (factor * factor)
    input_label = target.ravel().astype(np.int32)
    input_prob = np.rollaxis(predict, 1).reshape((c, -1))
    return _select_threshold(input_prob, input_label, thresh, min_kept_ds)


def reference_loss(predict, target, thresh, min_kept, factor):
    n, c, h, w = predict.shape
    prob = np.asarray(jax.nn.softmax(predict, axis=1))
    np_target = np.asarray(target)
    threshold = find_threshold_reference(prob, np_target, thresh, min_kept, factor)
    t = np_target.reshape(-1).astype(np.int32)
    p_pc = prob.transpose(0, 2, 3, 1).reshape(-1, c)
    pred_t = p_pc[np.arange(t.size), t]
    kept = (t != 0) & (pred_t <= threshold)
    new_t = np.where(kept, t, 0)
    logits_pc = np.asarray(predict).transpose(0, 2, 3, 1).reshape(-1, c).astype(np.float64)
    m = logits_pc.max(axis=-1, keepdims=True)
    lse = m[:, 0] + np.log(np.exp(logits_pc - m).sum(axis=-1))
    nll = lse - logits_pc[np.arange(t.size), new_t]
    return nll.mean()


# ----------------------------------- main -----------------------------------


if __name__ == "__main__":
    key = jax.random.PRNGKey(0)
    k1, k2 = jax.random.split(key)
    N, C, H, W = 2, 4, 16, 16
    predict = jax.random.normal(k1, (N, C, H, W), dtype=jnp.float32)
    target = jax.random.randint(k2, (N, H, W), 0, C, dtype=jnp.int32)

    # default config (threshold hits the 1.0 branch -> plain CE)
    mod_default = OhemCrossEntropy2d()
    loss_default = jax.block_until_ready(mod_default(predict, target))
    ref_default = reference_loss(predict, target, 0.7, 100000, 8)
    np.testing.assert_allclose(float(loss_default), float(ref_default),
                               rtol=1e-5, atol=1e-5)

    # config that actually exercises the OHEM masking
    mod = OhemCrossEntropy2d(thresh=0.5, min_kept=64, factor=8)
    loss = jax.block_until_ready(mod(predict, target))
    ref = reference_loss(predict, target, 0.5, 64, 8)
    assert np.isfinite(float(loss))
    np.testing.assert_allclose(float(loss), float(ref), rtol=1e-5, atol=1e-5)

    print("KERNEL_OK")
</pallas_src>

<mosaic_0001>
module attributes {stable_mosaic.version = 11 : i64} {
  func.func @_stats_kernel(%arg0: i32, %arg1: i32, %arg2: memref<1x4x16x16xf32, #tpu.memory_space<vmem>>, %arg3: memref<1x16x16xi32, #tpu.memory_space<vmem>>, %arg4: memref<16x128xf32, #tpu.memory_space<vmem>>, %arg5: memref<1x16x16xf32, #tpu.memory_space<vmem>>, %arg6: memref<1x16x16xf32, #tpu.memory_space<vmem>>, %arg7: memref<1x16x16xf32, #tpu.memory_space<vmem>>, %arg8: memref<1x4x16x128xf32, #tpu.memory_space<vmem>>) attributes {dimension_semantics = [#tpu.dimension_semantics<parallel>, #tpu.dimension_semantics<parallel>], iteration_bounds = array<i64: 2, 1>, scalar_prefetch = 0 : i64, scratch_operands = 0 : i64, tpu.core_type = #tpu.core_type<tc>, window_params = [{transform_indices = @transform_0, window_bounds = array<i64: 1, 4, 16, 16>}, {transform_indices = @transform_1, window_bounds = array<i64: 1, 16, 16>}, {pipeline_mode = #tpu.pipeline_mode<synchronous>, transform_indices = @transform_2, window_bounds = array<i64: 16, 128>}, {transform_indices = @transform_3, window_bounds = array<i64: 1, 16, 16>}, {transform_indices = @transform_4, window_bounds = array<i64: 1, 16, 16>}, {transform_indices = @transform_5, window_bounds = array<i64: 1, 16, 16>}, {transform_indices = @transform_6, window_bounds = array<i64: 1, 4, 16, 128>}]} {
    %c0 = arith.constant 0 : index
    %c0_0 = arith.constant 0 : index
    %c0_1 = arith.constant 0 : index
    %c0_2 = arith.constant 0 : index
    %0 = vector.load %arg2[%c0, %c0_0, %c0_1, %c0_2] : memref<1x4x16x16xf32, #tpu.memory_space<vmem>>, vector<1x4x16x16xf32>
    %c0_3 = arith.constant 0 : index
    %c0_4 = arith.constant 0 : index
    %c0_5 = arith.constant 0 : index
    %1 = vector.load %arg3[%c0_3, %c0_4, %c0_5] : memref<1x16x16xi32, #tpu.memory_space<vmem>>, vector<1x16x16xi32>
    %cst = arith.constant dense<0xFF800000> : vector<1x16x16xf32>
    %2 = vector.multi_reduction <maximumf>, %0, %cst [1] : vector<1x4x16x16xf32> to vector<1x16x16xf32>
    %3 = vector.shape_cast %2 : vector<1x16x16xf32> to vector<1x1x16x16xf32>
    %4 = vector.broadcast %3 : vector<1x1x16x16xf32> to vector<1x4x16x16xf32>
    %5 = arith.subf %0, %4 : vector<1x4x16x16xf32>
    %6 = math.exp %5 : vector<1x4x16x16xf32>
    %cst_6 = arith.constant dense<0.000000e+00> : vector<1x16x16xf32>
    %7 = vector.multi_reduction <add>, %6, %cst_6 [1] : vector<1x4x16x16xf32> to vector<1x16x16xf32>
    %cst_7 = arith.constant 1.000000e+00 : f32
    %8 = vector.broadcast %cst_7 : f32 to vector<1x16x16xf32>
    %9 = arith.divf %8, %7 : vector<1x16x16xf32>
    %10 = math.log %7 : vector<1x16x16xf32>
    %11 = arith.addf %2, %10 : vector<1x16x16xf32>
    %12 = vector.extract_strided_slice %0 {offsets = [0, 0, 0, 0], sizes = [1, 1, 16, 16], strides = [1, 1, 1, 1]} : vector<1x4x16x16xf32> to vector<1x1x16x16xf32>
    %13 = vector.shape_cast %12 : vector<1x1x16x16xf32> to vector<1x16x16xf32>
    %c1_i32 = arith.constant 1 : i32
    %14 = vector.broadcast %c1_i32 : i32 to vector<1x16x16xi32>
    %15 = arith.cmpi eq, %1, %14 : vector<1x16x16xi32>
    %16 = vector.extract_strided_slice %0 {offsets = [0, 1, 0, 0], sizes = [1, 1, 16, 16], strides = [1, 1, 1, 1]} : vector<1x4x16x16xf32> to vector<1x1x16x16xf32>
    %17 = vector.shape_cast %16 : vector<1x1x16x16xf32> to vector<1x16x16xf32>
    %18 = arith.select %15, %17, %13 : vector<1x16x16xi1>, vector<1x16x16xf32>
    %c2_i32 = arith.constant 2 : i32
    %19 = vector.broadcast %c2_i32 : i32 to vector<1x16x16xi32>
    %20 = arith.cmpi eq, %1, %19 : vector<1x16x16xi32>
    %21 = vector.extract_strided_slice %0 {offsets = [0, 2, 0, 0], sizes = [1, 1, 16, 16], strides = [1, 1, 1, 1]} : vector<1x4x16x16xf32> to vector<1x1x16x16xf32>
    %22 = vector.shape_cast %21 : vector<1x1x16x16xf32> to vector<1x16x16xf32>
    %23 = arith.select %20, %22, %18 : vector<1x16x16xi1>, vector<1x16x16xf32>
    %c3_i32 = arith.constant 3 : i32
    %24 = vector.broadcast %c3_i32 : i32 to vector<1x16x16xi32>
    %25 = arith.cmpi eq, %1, %24 : vector<1x16x16xi32>
    %26 = vector.extract_strided_slice %0 {offsets = [0, 3, 0, 0], sizes = [1, 1, 16, 16], strides = [1, 1, 1, 1]} : vector<1x4x16x16xf32> to vector<1x1x16x16xf32>
    %27 = vector.shape_cast %26 : vector<1x1x16x16xf32> to vector<1x16x16xf32>
    %28 = arith.select %25, %27, %23 : vector<1x16x16xi1>, vector<1x16x16xf32>
    %29 = arith.subf %28, %2 : vector<1x16x16xf32>
    %30 = math.exp %29 : vector<1x16x16xf32>
    %31 = arith.mulf %30, %9 : vector<1x16x16xf32>
    %c0_i32 = arith.constant 0 : i32
    %32 = vector.broadcast %c0_i32 : i32 to vector<1x16x16xi32>
    %33 = arith.cmpi sge, %1, %32 : vector<1x16x16xi32>
    %34 = arith.extui %33 : vector<1x16x16xi1> to vector<1x16x16xi32>
    %35 = arith.sitofp %34 : vector<1x16x16xi32> to vector<1x16x16xf32>
    %c0_8 = arith.constant 0 : index
    %c0_9 = arith.constant 0 : index
    %c0_10 = arith.constant 0 : index
    %36 = vector.load %arg5[%c0_8, %c0_9, %c0_10] : memref<1x16x16xf32, #tpu.memory_space<vmem>>, vector<1x16x16xf32>
    tpu.vector_store %arg5[%c0_8, %c0_9, %c0_10], %31 {strides = array<i32>} : memref<1x16x16xf32, #tpu.memory_space<vmem>>, vector<1x16x16xf32>,
    %37 = arith.subf %11, %28 : vector<1x16x16xf32>
    %38 = arith.mulf %37, %35 : vector<1x16x16xf32>
    %c0_11 = arith.constant 0 : index
    %c0_12 = arith.constant 0 : index
    %c0_13 = arith.constant 0 : index
    %39 = vector.load %arg6[%c0_11, %c0_12, %c0_13] : memref<1x16x16xf32, #tpu.memory_space<vmem>>, vector<1x16x16xf32>
    tpu.vector_store %arg6[%c0_11, %c0_12, %c0_13], %38 {strides = array<i32>} : memref<1x16x16xf32, #tpu.memory_space<vmem>>, vector<1x16x16xf32>,
    %40 = vector.extract_strided_slice %0 {offsets = [0, 0, 0, 0], sizes = [1, 1, 16, 16], strides = [1, 1, 1, 1]} : vector<1x4x16x16xf32> to vector<1x1x16x16xf32>
    %41 = vector.shape_cast %40 : vector<1x1x16x16xf32> to vector<1x16x16xf32>
    %42 = arith.subf %11, %41 : vector<1x16x16xf32>
    %43 = arith.mulf %42, %35 : vector<1x16x16xf32>
    %c0_14 = arith.constant 0 : index
    %c0_15 = arith.constant 0 : index
    %c0_16 = arith.constant 0 : index
    %44 = vector.load %arg7[%c0_14, %c0_15, %c0_16] : memref<1x16x16xf32, #tpu.memory_space<vmem>>, vector<1x16x16xf32>
    tpu.vector_store %arg7[%c0_14, %c0_15, %c0_16], %43 {strides = array<i32>} : memref<1x16x16xf32, #tpu.memory_space<vmem>>, vector<1x16x16xf32>,
    %45 = vector.shape_cast %9 : vector<1x16x16xf32> to vector<1x1x16x16xf32>
    %46 = vector.broadcast %45 : vector<1x1x16x16xf32> to vector<1x4x16x16xf32>
    %47 = arith.mulf %6, %46 : vector<1x4x16x16xf32>
    %48 = vector.shape_cast %47 : vector<1x4x16x16xf32> to vector<64x16xf32>
    %c0_17 = arith.constant 0 : index
    %c0_18 = arith.constant 0 : index
    %49 = vector.load %arg4[%c0_17, %c0_18] : memref<16x128xf32, #tpu.memory_space<vmem>>, vector<16x128xf32>
    %cst_19 = arith.constant dense<0.000000e+00> : vector<64x128xf32>
    %50 = tpu.matmul %48, %49, %cst_19 {dimension_numbers = #tpu.dot_dimension_numbers<[1], [0], [0], [1], [0, 0, 1, 1], [], []>} : vector<64x16xf32>, vector<16x128xf32>, vector<64x128xf32> -> vector<64x128xf32>
    %51 = vector.shape_cast %50 : vector<64x128xf32> to vector<1x4x16x128xf32>
    %c0_20 = arith.constant 0 : index
    %c0_21 = arith.constant 0 : index
    %c0_22 = arith.constant 0 : index
    %c0_23 = arith.constant 0 : index
    %52 = vector.load %arg8[%c0_20, %c0_21, %c0_22, %c0_23] : memref<1x4x16x128xf32, #tpu.memory_space<vmem>>, vector<1x4x16x128xf32>
    tpu.vector_store %arg8[%c0_20, %c0_21, %c0_22, %c0_23], %51 {strides = array<i32>} : memref<1x4x16x128xf32, #tpu.memory_space<vmem>>, vector<1x4x16x128xf32>,
    return
  }
  func.func @transform_0(%arg0: i32, %arg1: i32) -> (i32, i32, i32, i32) {
    %c0_i32 = arith.constant 0 : i32
    %c0_i32_0 = arith.constant 0 : i32
    %c0_i32_1 = arith.constant 0 : i32
    return %arg0, %c0_i32, %arg1, %c0_i32_0 : i32, i32, i32, i32
  }
  func.func @transform_1(%arg0: i32, %arg1: i32) -> (i32, i32, i32) {
    %c0_i32 = arith.constant 0 : i32
    %c0_i32_0 = arith.constant 0 : i32
    return %arg0, %arg1, %c0_i32 : i32, i32, i32
  }
  func.func @transform_2(%arg0: i32, %arg1: i32) -> (i32, i32) {
    %c0_i32 = arith.constant 0 : i32
    %c0_i32_0 = arith.constant 0 : i32
    %c0_i32_1 = arith.constant 0 : i32
    return %c0_i32, %c0_i32_0 : i32, i32
  }
  func.func @transform_3(%arg0: i32, %arg1: i32) -> (i32, i32, i32) {
    %c0_i32 = arith.constant 0 : i32
    %c0_i32_0 = arith.constant 0 : i32
    return %arg0, %arg1, %c0_i32 : i32, i32, i32
  }
  func.func @transform_4(%arg0: i32, %arg1: i32) -> (i32, i32, i32) {
    %c0_i32 = arith.constant 0 : i32
    %c0_i32_0 = arith.constant 0 : i32
    return %arg0, %arg1, %c0_i32 : i32, i32, i32
  }
  func.func @transform_5(%arg0: i32, %arg1: i32) -> (i32, i32, i32) {
    %c0_i32 = arith.constant 0 : i32
    %c0_i32_0 = arith.constant 0 : i32
    return %arg0, %arg1, %c0_i32 : i32, i32, i32
  }
  func.func @transform_6(%arg0: i32, %arg1: i32) -> (i32, i32, i32, i32) {
    %c0_i32 = arith.constant 0 : i32
    %c0_i32_0 = arith.constant 0 : i32
    %c0_i32_1 = arith.constant 0 : i32
    return %arg0, %c0_i32, %arg1, %c0_i32_0 : i32, i32, i32, i32
  }
}

module attributes {stable_mosaic.version = 11 : i64} {
  func.func @_ohem_loss_kernel(%arg0: i32, %arg1: i32, %arg2: memref<1xf32, #tpu.memory_space<smem>>, %arg3: memref<1x16x16xf32, #tpu.memory_space<vmem>>, %arg4: memref<1x16x16xf32, #tpu.memory_space<vmem>>, %arg5: memref<1x16x16xf32, #tpu.memory_space<vmem>>, %arg6: memref<1x1x8x16xf32, #tpu.memory_space<vmem>>) attributes {dimension_semantics = [#tpu.dimension_semantics<parallel>, #tpu.dimension_semantics<parallel>], iteration_bounds = array<i64: 2, 1>, scalar_prefetch = 1 : i64, scratch_operands = 0 : i64, tpu.core_type = #tpu.core_type<tc>, window_params = [{transform_indices = @transform_0, window_bounds = array<i64: 1, 16, 16>}, {transform_indices = @transform_1, window_bounds = array<i64: 1, 16, 16>}, {transform_indices = @transform_2, window_bounds = array<i64: 1, 16, 16>}, {transform_indices = @transform_3, window_bounds = array<i64: 1, 1, 8, 16>}]} {
    %c0 = arith.constant 0 : index
    %0 = memref.load %arg2[%c0] : memref<1xf32, #tpu.memory_space<smem>>
    %c0_0 = arith.constant 0 : index
    %c0_1 = arith.constant 0 : index
    %c0_2 = arith.constant 0 : index
    %1 = vector.load %arg3[%c0_0, %c0_1, %c0_2] : memref<1x16x16xf32, #tpu.memory_space<vmem>>, vector<1x16x16xf32>
    %2 = vector.broadcast %0 : f32 to vector<1x16x16xf32>
    %3 = arith.cmpf ole, %1, %2 : vector<1x16x16xf32>
    %c0_3 = arith.constant 0 : index
    %c0_4 = arith.constant 0 : index
    %c0_5 = arith.constant 0 : index
    %4 = vector.load %arg4[%c0_3, %c0_4, %c0_5] : memref<1x16x16xf32, #tpu.memory_space<vmem>>, vector<1x16x16xf32>
    %c0_6 = arith.constant 0 : index
    %c0_7 = arith.constant 0 : index
    %c0_8 = arith.constant 0 : index
    %5 = vector.load %arg5[%c0_6, %c0_7, %c0_8] : memref<1x16x16xf32, #tpu.memory_space<vmem>>, vector<1x16x16xf32>
    %6 = arith.select %3, %4, %5 : vector<1x16x16xi1>, vector<1x16x16xf32>
    %7 = vector.shape_cast %6 : vector<1x16x16xf32> to vector<1x2x8x16xf32>
    %cst = arith.constant dense<0.000000e+00> : vector<1x8x16xf32>
    %8 = vector.multi_reduction <add>, %7, %cst [1] : vector<1x2x8x16xf32> to vector<1x8x16xf32>
    %9 = vector.shape_cast %8 : vector<1x8x16xf32> to vector<1x1x8x16xf32>
    %c0_9 = arith.constant 0 : index
    %c0_10 = arith.constant 0 : index
    %c0_11 = arith.constant 0 : index
    %c0_12 = arith.constant 0 : index
    %10 = vector.load %arg6[%c0_9, %c0_10, %c0_11, %c0_12] : memref<1x1x8x16xf32, #tpu.memory_space<vmem>>, vector<1x1x8x16xf32>
    tpu.vector_store %arg6[%c0_9, %c0_10, %c0_11, %c0_12], %9 {strides = array<i32>} : memref<1x1x8x16xf32, #tpu.memory_space<vmem>>, vector<1x1x8x16xf32>,
    return
  }
  func.func @transform_0(%arg0: i32, %arg1: i32, %arg2: memref<1xf32, #tpu.memory_space<smem>>) -> (i32, i32, i32) {
    %c0_i32 = arith.constant 0 : i32
    %c0_i32_0 = arith.constant 0 : i32
    return %arg0, %arg1, %c0_i32 : i32, i32, i32
  }
  func.func @transform_1(%arg0: i32, %arg1: i32, %arg2: memref<1xf32, #tpu.memory_space<smem>>) -> (i32, i32, i32) {
    %c0_i32 = arith.constant 0 : i32
    %c0_i32_0 = arith.constant 0 : i32
    return %arg0, %arg1, %c0_i32 : i32, i32, i32
  }
  func.func @transform_2(%arg0: i32, %arg1: i32, %arg2: memref<1xf32, #tpu.memory_space<smem>>) -> (i32, i32, i32) {
    %c0_i32 = arith.constant 0 : i32
    %c0_i32_0 = arith.constant 0 : i32
    return %arg0, %arg1, %c0_i32 : i32, i32, i32
  }
  func.func @transform_3(%arg0: i32, %arg1: i32, %arg2: memref<1xf32, #tpu.memory_space<smem>>) -> (i32, i32, i32, i32) {
    %c0_i32 = arith.constant 0 : i32
    %c0_i32_0 = arith.constant 0 : i32
    %c0_i32_1 = arith.constant 0 : i32
    return %arg0, %arg1, %c0_i32, %c0_i32_0 : i32, i32, i32, i32
  }
}

</mosaic_0001>

<llo_original>
// kernel: _ohem_forward.3
$region0: #{_ohem_forward.3}
  #allocation0 [shape = 'u32[]', space=smem, size = 0x4, offset = 0x4, fixed_abs, tag = 'smem constant byte address 0x4 - core index']
  #allocation1 [shape = 'u32[144,128]{1,0:T(1,128)}', space=vmem, size = 0x12000, scoped, tag = 'internal scratch']
  #allocation2 [shape = 's32[1]{0}', space=sflag, size = 0x4, scoped, tag = 'scoped memory for _ohem_forward.3']
  #allocation3 [shape = 'f32[1]{0:T(128)S(6)}', space=smem, size = 0x200, scoped, tag = 'prefetched SMEM operand 0']
  %s0 = inlined_call_operand.<no memory space> [shape: f32[1], index: 0, kind: input, shape index: {}]
  %s1 = inlined_call_operand.vmem [shape: f32[2,16,16], index: 1, kind: input, shape index: {}]
  %s2 = inlined_call_operand.vmem [shape: f32[2,16,16], index: 2, kind: input, shape index: {}]
  %s3 = inlined_call_operand.vmem [shape: f32[2,16,16], index: 3, kind: input, shape index: {}]
  %s4 = inlined_call_operand.vmem [shape: f32[2,1,8,16], index: 4, kind: output, shape index: {}]
  %s5 = sld [smem:[#allocation0]]
  $region45: #{_ohem_forward.3} parent=0
    _
  %s7 = ssub.s32 1, %s5
  %s8 = scalar_select 0, %s7, %s5
  %9 = sst [smem:[#allocation3]] %s0
  loop: start=0, step=1, limit=4
  $region2: #{_ohem_forward.3} parent=0 // loop_pre_header
    _
  $region3: #{_ohem_forward.3} parent=0 // loop_header
    %s11 = sphi 0, %s15
    %p12 = scmp.ge.s32.totalorder %s11, 4
    %s18 = sphi 0, %s30
    %s19 = sphi 0, %s26
    %s20 = sphi 0, %s18
    %s21 = sphi 0, %s19
    %s22 = sphi 0, %s20
    %s23 = sphi 0, %s21
    %s35 = sphi 0, %s37
    %s38 = sphi 0, %s35
    %s39 = sphi 0, %s38
    %s55 = sphi 0, %s39
    %s63 = sphi 0, %s65
    %s66 = sphi 0, %s63
    %s67 = sphi 0, %s66
    %s83 = sphi 0, %s67
    %s91 = sphi 0, %s93
    %s94 = sphi 0, %s91
    %s95 = sphi 0, %s94
    %s111 = sphi 0, %s95
    %s119 = sphi 0, %s121
    %s122 = sphi 0, %s119
    %s123 = sphi 0, %s122
    %s139 = sphi 0, %s123
  $region4: #{_ohem_forward.3} parent=0 // loop_header_branch
    %14 = sbr.rel (%p12) target = $region8
  $region5: #{_ohem_forward.3} parent=0 // loop_body
    %s16 = ssub.s32 %s11, 1
    %s17 = ssub.s32 %s11, 2
    %s24 = sadd.s32 1, %s19
    %p25 = scmp.ge.s32.totalorder %s24, 1
    %s26 = scalar_select %p25, 0, %s24
    %s27 = sadd.s32 1, %s18
    %s28 = scalar_select %p25, %s27, %s18
    %p29 = scmp.ge.s32.totalorder %s28, 2
    %s30 = scalar_select %p29, 0, %s28
    %s31 = ssub.s32 %s18, %s30
    %s32 = ssub.s32 %s19, %s26
    %s33 = sor.u32 %s31, %s32
    %p34 = scmp.eq.s32.totalorder %s33, 0
    %s36 = sadd.s32 %s35, 1
    %s37 = scalar_select %p34, %s35, %s36
    %p40 = pneg %p34
    %p41 = scmp.eq.s32.totalorder %s11, 1
    %p42 = por %p40, %p41
    %p43 = scmp.ne.s32.totalorder %s35, %s38
    %p44 = scmp.eq.s32.totalorder %s11, 0
    %p45 = por %p43, %p44
    %p46 = scmp.ne.s32.totalorder %s35, %s38
    %p47 = scmp.eq.s32.totalorder %s16, 1
    %p48 = por %p46, %p47
    %p49 = scmp.ne.s32.totalorder %s38, %s39
    %p50 = scmp.eq.s32.totalorder %s16, 0
    %p51 = por %p49, %p50
    %p52 = scmp.ne.s32.totalorder %s38, %s39
    %p53 = scmp.eq.s32.totalorder %s17, 1
    %p54 = por %p52, %p53
    %p56 = scmp.ne.s32.totalorder %s39, %s55
    %p57 = scmp.eq.s32.totalorder %s17, 0
    %p58 = por %p56, %p57
    %s59 = ssub.s32 %s18, %s30
    %s60 = ssub.s32 %s19, %s26
    %s61 = sor.u32 %s59, %s60
    %p62 = scmp.eq.s32.totalorder %s61, 0
    %s64 = sadd.s32 %s63, 1
    %s65 = scalar_select %p62, %s63, %s64
    %p68 = pneg %p62
    %p69 = scmp.eq.s32.totalorder %s11, 1
    %p70 = por %p68, %p69
    %p71 = scmp.ne.s32.totalorder %s63, %s66
    %p72 = scmp.eq.s32.totalorder %s11, 0
    %p73 = por %p71, %p72
    %p74 = scmp.ne.s32.totalorder %s63, %s66
    %p75 = scmp.eq.s32.totalorder %s16, 1
    %p76 = por %p74, %p75
    %p77 = scmp.ne.s32.totalorder %s66, %s67
    %p78 = scmp.eq.s32.totalorder %s16, 0
    %p79 = por %p77, %p78
    %p80 = scmp.ne.s32.totalorder %s66, %s67
    %p81 = scmp.eq.s32.totalorder %s17, 1
    %p82 = por %p80, %p81
    %p84 = scmp.ne.s32.totalorder %s67, %s83
    %p85 = scmp.eq.s32.totalorder %s17, 0
    %p86 = por %p84, %p85
    %s87 = ssub.s32 %s18, %s30
    %s88 = ssub.s32 %s19, %s26
    %s89 = sor.u32 %s87, %s88
    %p90 = scmp.eq.s32.totalorder %s89, 0
    %s92 = sadd.s32 %s91, 1
    %s93 = scalar_select %p90, %s91, %s92
    %p96 = pneg %p90
    %p97 = scmp.eq.s32.totalorder %s11, 1
    %p98 = por %p96, %p97
    %p99 = scmp.ne.s32.totalorder %s91, %s94
    %p100 = scmp.eq.s32.totalorder %s11, 0
    %p101 = por %p99, %p100
    %p102 = scmp.ne.s32.totalorder %s91, %s94
    %p103 = scmp.eq.s32.totalorder %s16, 1
    %p104 = por %p102, %p103
    %p105 = scmp.ne.s32.totalorder %s94, %s95
    %p106 = scmp.eq.s32.totalorder %s16, 0
    %p107 = por %p105, %p106
    %p108 = scmp.ne.s32.totalorder %s94, %s95
    %p109 = scmp.eq.s32.totalorder %s17, 1
    %p110 = por %p108, %p109
    %p112 = scmp.ne.s32.totalorder %s95, %s111
    %p113 = scmp.eq.s32.totalorder %s17, 0
    %p114 = por %p112, %p113
    %s115 = ssub.s32 %s18, %s30
    %s116 = ssub.s32 %s19, %s26
    %s117 = sor.u32 %s115, %s116
    %p118 = scmp.eq.s32.totalorder %s117, 0
    %s120 = sadd.s32 %s119, 1
    %s121 = scalar_select %p118, %s119, %s120
    %p124 = pneg %p118
    %p125 = scmp.eq.s32.totalorder %s11, 1
    %p126 = por %p124, %p125
    %p127 = scmp.ne.s32.totalorder %s119, %s122
    %p128 = scmp.eq.s32.totalorder %s11, 0
    %p129 = por %p127, %p128
    %p130 = scmp.ne.s32.totalorder %s119, %s122
    %p131 = scmp.eq.s32.totalorder %s16, 1
    %p132 = por %p130, %p131
    %p133 = scmp.ne.s32.totalorder %s122, %s123
    %p134 = scmp.eq.s32.totalorder %s16, 0
    %p135 = por %p133, %p134
    %p136 = scmp.ne.s32.totalorder %s122, %s123
    %p137 = scmp.eq.s32.totalorder %s17, 1
    %p138 = por %p136, %p137
    %p140 = scmp.ne.s32.totalorder %s123, %s139
    %p141 = scmp.eq.s32.totalorder %s17, 0
    %p142 = por %p140, %p141
    %p143 = scmp.le.s32.totalorder 1, %s11
    %p144 = scmp.lt.s32.totalorder %s11, 3
    %p145 = pnand %p143, %p144
    %p146 = pneg %p145
    // Predicated region
    $region9: #{_ohem_forward.3} parent=5 // pred_check
      _
    $region10: #{_ohem_forward.3} parent=5 // pred_check_branch
      %148 = sbr.rel (%p145) target = $region12
    $region11: #{_ohem_forward.3} parent=5 // pred_region
      %s149 = ssub.s32 %s11, 1
    $region12: #{_ohem_forward.3} parent=5 // pred_fallthru
      _
    %p150 = scmp.lt.s32.totalorder %s11, 2
    // Predicated region
    $region13: #{_ohem_forward.3} parent=5 // pred_check
      %p151 = pneg %p150
    $region14: #{_ohem_forward.3} parent=5 // pred_check_branch
      %153 = sbr.rel (%p151) target = $region16
    $region15: #{_ohem_forward.3} parent=5 // pred_region
      // Predicated region
      $region17: #{_ohem_forward.3} parent=15 // pred_check
        %p154 = pneg %p45
      $region18: #{_ohem_forward.3} parent=15 // pred_check_branch
        %156 = sbr.rel (%p154) target = $region20
      $region19: #{_ohem_forward.3} parent=15 // pred_region
        %s157 = smul.u32 2, %s19
        %p158 = scmp.lt.s32.totalorder %s18, 1
        %s159 = scalar_select %p158, %s18, 1
        %p160 = scmp.lt.s32.totalorder %s157, 1
        %s161 = scalar_select %p160, %s157, 1
        %s162 = smul.addr %s159, 2
        %s163 = sadd.s32 %s161, %s162
        %s164 = smul.addr %s163, 8
        %s165 = scalar_lea.vmem %s1, %s164
        %s166 = smul.u32 2, %s19
      $region20: #{_ohem_forward.3} parent=15 // pred_fallthru
        _
      // Predicated region
      $region21: #{_ohem_forward.3} parent=15 // pred_check
        %p167 = pneg %p73
      $region22: #{_ohem_forward.3} parent=15 // pred_check_branch
        %169 = sbr.rel (%p167) target = $region24
      $region23: #{_ohem_forward.3} parent=15 // pred_region
        %s170 = smul.u32 2, %s19
        %p171 = scmp.lt.s32.totalorder %s18, 1
        %s172 = scalar_select %p171, %s18, 1
        %p173 = scmp.lt.s32.totalorder %s170, 1
        %s174 = scalar_select %p173, %s170, 1
        %s175 = smul.addr %s172, 2
        %s176 = sadd.s32 %s174, %s175
        %s177 = smul.addr %s176, 8
        %s178 = scalar_lea.vmem %s2, %s177
        %s179 = smul.u32 2, %s19
      $region24: #{_ohem_forward.3} parent=15 // pred_fallthru
        _
      // Predicated region
      $region25: #{_ohem_forward.3} parent=15 // pred_check
        %p180 = pneg %p101
      $region26: #{_ohem_forward.3} parent=15 // pred_check_branch
        %182 = sbr.rel (%p180) target = $region28
      $region27: #{_ohem_forward.3} parent=15 // pred_region
        %s183 = smul.u32 2, %s19
        %p184 = scmp.lt.s32.totalorder %s18, 1
        %s185 = scalar_select %p184, %s18, 1
        %p186 = scmp.lt.s32.totalorder %s183, 1
        %s187 = scalar_select %p186, %s183, 1
        %s188 = smul.addr %s185, 2
        %s189 = sadd.s32 %s187, %s188
        %s190 = smul.addr %s189, 8
        %s191 = scalar_lea.vmem %s3, %s190
        %s192 = smul.u32 2, %s19
      $region28: #{_ohem_forward.3} parent=15 // pred_fallthru
        _
    $region16: #{_ohem_forward.3} parent=5 // pred_fallthru
      _
    %p193 = scmp.le.s32.totalorder 1, %s11
    %p194 = scmp.lt.s32.totalorder %s11, 3
    %p195 = pnand %p193, %p194
    %p196 = pneg %p195
    // Predicated region
    $region29: #{_ohem_forward.3} parent=5 // pred_check
      _
    $region30: #{_ohem_forward.3} parent=5 // pred_check_branch
      %198 = sbr.rel (%p195) target = $region32
    $region31: #{_ohem_forward.3} parent=5 // pred_region
      %s199 = ssub.s32 %s11, 1
      %s200 = smul.u32 2, %s21
      %p201 = scmp.lt.s32.totalorder %s20, 1
      %s202 = scalar_select %p201, %s20, 1
      %p203 = scmp.lt.s32.totalorder %s200, 1
      %s204 = scalar_select %p203, %s200, 1
      %s205 = smul.addr %s202, 2
      %s206 = sadd.s32 %s204, %s205
      %s207 = smul.addr %s206, 8
      %s208 = scalar_lea.vmem %s1, %s207
      %p209 = pneg %p51
      %p210 = pneg %p48
      %s211 = smul.u32 2, %s21
      %p212 = scmp.lt.s32.totalorder %s20, 1
      %s213 = scalar_select %p212, %s20, 1
      %p214 = scmp.lt.s32.totalorder %s211, 1
      %s215 = scalar_select %p214, %s211, 1
      %s216 = smul.addr %s213, 2
      %s217 = sadd.s32 %s215, %s216
      %s218 = smul.addr %s217, 8
      %s219 = scalar_lea.vmem %s2, %s218
      %p220 = pneg %p79
      %p221 = pneg %p76
      %s222 = smul.u32 2, %s21
      %p223 = scmp.lt.s32.totalorder %s20, 1
      %s224 = scalar_select %p223, %s20, 1
      %p225 = scmp.lt.s32.totalorder %s222, 1
      %s226 = scalar_select %p225, %s222, 1
      %s227 = smul.addr %s224, 2
      %s228 = sadd.s32 %s226, %s227
      %s229 = smul.addr %s228, 8
      %s230 = scalar_lea.vmem %s3, %s229
      %p231 = pneg %p107
      %p232 = pneg %p104
      %p233 = pneg %p135
      %p234 = pneg %p132
      %p235 = scmp.lt.s32.totalorder %s20, 1
      %s236 = scalar_select %p235, %s20, 1
      %p237 = scmp.lt.s32.totalorder %s21, 0
      %s238 = scalar_select %p237, %s21, 0
      %s239 = sadd.s32 %s238, %s236
      %s240 = smul.addr %s239, 8
      %s241 = scalar_lea.vmem %s4, %s240
      %s242 = smul.u32 2, %s21
      %p243 = scmp.lt.s32.totalorder %s20, 1
      %s244 = scalar_select %p243, %s20, 1
      %p245 = scmp.lt.s32.totalorder %s242, 1
      %s246 = scalar_select %p245, %s242, 1
      %s247 = smul.addr %s244, 2
      %s248 = sadd.s32 %s246, %s247
      %s249 = smul.addr %s248, 8
      %s250 = scalar_lea.vmem %s1, %s249
      %s251 = smul.u32 2, %s21
      %s252 = smul.u32 2, %s21
      %p253 = scmp.lt.s32.totalorder %s20, 1
      %s254 = scalar_select %p253, %s20, 1
      %p255 = scmp.lt.s32.totalorder %s252, 1
      %s256 = scalar_select %p255, %s252, 1
      %s257 = smul.addr %s254, 2
      %s258 = sadd.s32 %s256, %s257
      %s259 = smul.addr %s258, 8
      %s260 = scalar_lea.vmem %s2, %s259
      %s261 = smul.u32 2, %s21
      %s262 = smul.u32 2, %s21
      %p263 = scmp.lt.s32.totalorder %s20, 1
      %s264 = scalar_select %p263, %s20, 1
      %p265 = scmp.lt.s32.totalorder %s262, 1
      %s266 = scalar_select %p265, %s262, 1
      %s267 = smul.addr %s264, 2
      %s268 = sadd.s32 %s266, %s267
      %s269 = smul.addr %s268, 8
      %s270 = scalar_lea.vmem %s3, %s269
      %s271 = smul.u32 2, %s21
      %p272 = scmp.lt.s32.totalorder %s20, 1
      %s273 = scalar_select %p272, %s20, 1
      %p274 = scmp.lt.s32.totalorder %s21, 0
      %s275 = scalar_select %p274, %s21, 0
      %s276 = sadd.s32 %s275, %s273
      %s277 = smul.addr %s276, 8
      %s278 = scalar_lea.vmem %s4, %s277
      %s279 = sld [smem:[#allocation3]]
      %v280 = vld [vmem:[%s250] sm:$0xff]
      %v281 = vld [vmem:[%s250 + $0x8] sm:$0xff]
      %v282 = vstv %s279
      %vm283 = vcmp.le.f32.partialorder %v280, %v282
      %vm284 = vcmp.le.f32.partialorder %v281, %v282
      %v285 = vld [vmem:[%s260] sm:$0xff]
      %v286 = vld [vmem:[%s260 + $0x8] sm:$0xff]
      %v287 = vld [vmem:[%s270] sm:$0xff]
      %v288 = vld [vmem:[%s270 + $0x8] sm:$0xff]
      %v289 = vsel %vm283, %v285, %v287
      %v290 = vsel %vm284, %v286, %v288
      %vm291 = vcmask 130048
      %v292 = vsel %vm291, %v289, 0.0
      %v293 = vsel %vm291, %v290, 0.0
      %v294 = vadd.f32 %v292, %v293
      %295 = vst.msk [vmem:[%s278] sm:$0xff] %vm291, %v294
      %p296 = scmp.lt.s32.totalorder %s20, 1
      %s297 = scalar_select %p296, %s20, 1
      %p298 = scmp.lt.s32.totalorder %s21, 0
      %s299 = scalar_select %p298, %s21, 0
      %s300 = sadd.s32 %s299, %s297
      %s301 = smul.addr %s300, 8
      %s302 = scalar_lea.vmem %s4, %s301
      // Predicated region
      $region33: #{_ohem_forward.3} parent=31 // pred_check
        %p303 = pneg %p132
      $region34: #{_ohem_forward.3} parent=31 // pred_check_branch
        %305 = sbr.rel (%p303) target = $region36
      $region35: #{_ohem_forward.3} parent=31 // pred_region
        _
      $region36: #{_ohem_forward.3} parent=31 // pred_fallthru
        _
    $region32: #{_ohem_forward.3} parent=5 // pred_fallthru
      _
    %p306 = scmp.le.s32.totalorder 2, %s11
    // Predicated region
    $region37: #{_ohem_forward.3} parent=5 // pred_check
      %p307 = pneg %p306
    $region38: #{_ohem_forward.3} parent=5 // pred_check_branch
      %309 = sbr.rel (%p307) target = $region40
    $region39: #{_ohem_forward.3} parent=5 // pred_region
      %s310 = ssub.s32 %s11, 2
      // Predicated region
      $region41: #{_ohem_forward.3} parent=39 // pred_check
        %p311 = pneg %p138
      $region42: #{_ohem_forward.3} parent=39 // pred_check_branch
        %313 = sbr.rel (%p311) target = $region44
      $region43: #{_ohem_forward.3} parent=39 // pred_region
        %p314 = scmp.lt.s32.totalorder %s22, 1
        %s315 = scalar_select %p314, %s22, 1
        %p316 = scmp.lt.s32.totalorder %s23, 0
        %s317 = scalar_select %p316, %s23, 0
        %s318 = sadd.s32 %s317, %s315
        %s319 = smul.addr %s318, 8
        %s320 = scalar_lea.vmem %s4, %s319
      $region44: #{_ohem_forward.3} parent=39 // pred_fallthru
        _
    $region40: #{_ohem_forward.3} parent=5 // pred_fallthru
      _
  $region6: #{_ohem_forward.3} parent=0 // loop_footer
    %s15 = sadd.s32 1, %s11
  $region7: #{_ohem_forward.3} parent=0 // loop_footer_branch
    %10 = sbr.rel target = $region3
  $region8: #{_ohem_forward.3} parent=0 // loop_exit
    _

// kernel: _ohem_forward.2
$region0: #{_ohem_forward.2}
  #allocation0 [shape = 'u32[]', space=smem, size = 0x4, offset = 0x4, fixed_abs, tag = 'smem constant byte address 0x4 - core index']
  #allocation1 [shape = 'u32[144,128]{1,0:T(1,128)}', space=vmem, size = 0x12000, scoped, tag = 'internal scratch']
  %s0 = inlined_call_operand.vmem [shape: f32[2,4,16,16], index: 0, kind: input, shape index: {}]
  %s1 = inlined_call_operand.vmem [shape: s32[2,16,16], index: 1, kind: input, shape index: {}]
  %s2 = inlined_call_operand.vmem [shape: f32[16,128], index: 2, kind: input, shape index: {}]
  %s3 = inlined_call_operand.vmem [shape: f32[2,16,16], index: 3, kind: output, shape index: {0}]
  %s4 = inlined_call_operand.vmem [shape: f32[2,16,16], index: 4, kind: output, shape index: {1}]
  %s5 = inlined_call_operand.vmem [shape: f32[2,16,16], index: 5, kind: output, shape index: {2}]
  %s6 = inlined_call_operand.vmem [shape: f32[2,4,16,128], index: 6, kind: output, shape index: {3}]
  %7 = xla_tuple %s3, %s4, %s5, %s6
  %s8 = sld [smem:[#allocation0]]
  $region69: #{_ohem_forward.2} parent=0
    _
  %s10 = ssub.s32 1, %s8
  %s11 = scalar_select 0, %s10, %s8
  loop: start=0, step=1, limit=4
  $region2: #{_ohem_forward.2} parent=0 // loop_pre_header
    _
  $region3: #{_ohem_forward.2} parent=0 // loop_header
    %s13 = sphi 0, %s17
    %p14 = scmp.ge.s32.totalorder %s13, 4
    %s20 = sphi 0, %s32
    %s21 = sphi 0, %s28
    %s22 = sphi 0, %s20
    %s23 = sphi 0, %s21
    %s24 = sphi 0, %s22
    %s25 = sphi 0, %s23
    %s37 = sphi 0, %s39
    %s40 = sphi 0, %s37
    %s41 = sphi 0, %s40
    %s57 = sphi 0, %s41
    %s65 = sphi 0, %s67
    %s68 = sphi 0, %s65
    %s69 = sphi 0, %s68
    %s85 = sphi 0, %s69
    %s89 = sphi 0, %s89
    %s91 = sphi 0, %s89
    %s92 = sphi 0, %s91
    %s106 = sphi 0, %s92
    %s114 = sphi 0, %s116
    %s117 = sphi 0, %s114
    %s118 = sphi 0, %s117
    %s134 = sphi 0, %s118
    %s142 = sphi 0, %s144
    %s145 = sphi 0, %s142
    %s146 = sphi 0, %s145
    %s162 = sphi 0, %s146
    %s170 = sphi 0, %s172
    %s173 = sphi 0, %s170
    %s174 = sphi 0, %s173
    %s190 = sphi 0, %s174
    %s198 = sphi 0, %s200
    %s201 = sphi 0, %s198
    %s202 = sphi 0, %s201
    %s218 = sphi 0, %s202
  $region4: #{_ohem_forward.2} parent=0 // loop_header_branch
    %16 = sbr.rel (%p14) target = $region8
  $region5: #{_ohem_forward.2} parent=0 // loop_body
    %s18 = ssub.s32 %s13, 1
    %s19 = ssub.s32 %s13, 2
    %s26 = sadd.s32 1, %s21
    %p27 = scmp.ge.s32.totalorder %s26, 1
    %s28 = scalar_select %p27, 0, %s26
    %s29 = sadd.s32 1, %s20
    %s30 = scalar_select %p27, %s29, %s20
    %p31 = scmp.ge.s32.totalorder %s30, 2
    %s32 = scalar_select %p31, 0, %s30
    %s33 = ssub.s32 %s20, %s32
    %s34 = ssub.s32 %s21, %s28
    %s35 = sor.u32 %s33, %s34
    %p36 = scmp.eq.s32.totalorder %s35, 0
    %s38 = sadd.s32 %s37, 1
    %s39 = scalar_select %p36, %s37, %s38
    %p42 = pneg %p36
    %p43 = scmp.eq.s32.totalorder %s13, 1
    %p44 = por %p42, %p43
    %p45 = scmp.ne.s32.totalorder %s37, %s40
    %p46 = scmp.eq.s32.totalorder %s13, 0
    %p47 = por %p45, %p46
    %p48 = scmp.ne.s32.totalorder %s37, %s40
    %p49 = scmp.eq.s32.totalorder %s18, 1
    %p50 = por %p48, %p49
    %p51 = scmp.ne.s32.totalorder %s40, %s41
    %p52 = scmp.eq.s32.totalorder %s18, 0
    %p53 = por %p51, %p52
    %p54 = scmp.ne.s32.totalorder %s40, %s41
    %p55 = scmp.eq.s32.totalorder %s19, 1
    %p56 = por %p54, %p55
    %p58 = scmp.ne.s32.totalorder %s41, %s57
    %p59 = scmp.eq.s32.totalorder %s19, 0
    %p60 = por %p58, %p59
    %s61 = ssub.s32 %s20, %s32
    %s62 = ssub.s32 %s21, %s28
    %s63 = sor.u32 %s61, %s62
    %p64 = scmp.eq.s32.totalorder %s63, 0
    %s66 = sadd.s32 %s65, 1
    %s67 = scalar_select %p64, %s65, %s66
    %p70 = pneg %p64
    %p71 = scmp.eq.s32.totalorder %s13, 1
    %p72 = por %p70, %p71
    %p73 = scmp.ne.s32.totalorder %s65, %s68
    %p74 = scmp.eq.s32.totalorder %s13, 0
    %p75 = por %p73, %p74
    %p76 = scmp.ne.s32.totalorder %s65, %s68
    %p77 = scmp.eq.s32.totalorder %s18, 1
    %p78 = por %p76, %p77
    %p79 = scmp.ne.s32.totalorder %s68, %s69
    %p80 = scmp.eq.s32.totalorder %s18, 0
    %p81 = por %p79, %p80
    %p82 = scmp.ne.s32.totalorder %s68, %s69
    %p83 = scmp.eq.s32.totalorder %s19, 1
    %p84 = por %p82, %p83
    %p86 = scmp.ne.s32.totalorder %s69, %s85
    %p87 = scmp.eq.s32.totalorder %s19, 0
    %p88 = por %p86, %p87
    %s90 = sadd.s32 %s89, 1
    %p93 = scmp.eq.s32.totalorder %s13, 1
    %p94 = scmp.ne.s32.totalorder %s89, %s91
    %p95 = scmp.eq.s32.totalorder %s13, 0
    %p96 = por %p94, %p95
    %p97 = scmp.ne.s32.totalorder %s89, %s91
    %p98 = scmp.eq.s32.totalorder %s18, 1
    %p99 = por %p97, %p98
    %p100 = scmp.ne.s32.totalorder %s91, %s92
    %p101 = scmp.eq.s32.totalorder %s18, 0
    %p102 = por %p100, %p101
    %p103 = scmp.ne.s32.totalorder %s91, %s92
    %p104 = scmp.eq.s32.totalorder %s19, 1
    %p105 = por %p103, %p104
    %p107 = scmp.ne.s32.totalorder %s92, %s106
    %p108 = scmp.eq.s32.totalorder %s19, 0
    %p109 = por %p107, %p108
    %s110 = ssub.s32 %s20, %s32
    %s111 = ssub.s32 %s21, %s28
    %s112 = sor.u32 %s110, %s111
    %p113 = scmp.eq.s32.totalorder %s112, 0
    %s115 = sadd.s32 %s114, 1
    %s116 = scalar_select %p113, %s114, %s115
    %p119 = pneg %p113
    %p120 = scmp.eq.s32.totalorder %s13, 1
    %p121 = por %p119, %p120
    %p122 = scmp.ne.s32.totalorder %s114, %s117
    %p123 = scmp.eq.s32.totalorder %s13, 0
    %p124 = por %p122, %p123
    %p125 = scmp.ne.s32.totalorder %s114, %s117
    %p126 = scmp.eq.s32.totalorder %s18, 1
    %p127 = por %p125, %p126
    %p128 = scmp.ne.s32.totalorder %s117, %s118
    %p129 = scmp.eq.s32.totalorder %s18, 0
    %p130 = por %p128, %p129
    %p131 = scmp.ne.s32.totalorder %s117, %s118
    %p132 = scmp.eq.s32.totalorder %s19, 1
    %p133 = por %p131, %p132
    %p135 = scmp.ne.s32.totalorder %s118, %s134
    %p136 = scmp.eq.s32.totalorder %s19, 0
    %p137 = por %p135, %p136
    %s138 = ssub.s32 %s20, %s32
    %s139 = ssub.s32 %s21, %s28
    %s140 = sor.u32 %s138, %s139
    %p141 = scmp.eq.s32.totalorder %s140, 0
    %s143 = sadd.s32 %s142, 1
    %s144 = scalar_select %p141, %s142, %s143
    %p147 = pneg %p141
    %p148 = scmp.eq.s32.totalorder %s13, 1
    %p149 = por %p147, %p148
    %p150 = scmp.ne.s32.totalorder %s142, %s145
    %p151 = scmp.eq.s32.totalorder %s13, 0
    %p152 = por %p150, %p151
    %p153 = scmp.ne.s32.totalorder %s142, %s145
    %p154 = scmp.eq.s32.totalorder %s18, 1
    %p155 = por %p153, %p154
    %p156 = scmp.ne.s32.totalorder %s145, %s146
    %p157 = scmp.eq.s32.totalorder %s18, 0
    %p158 = por %p156, %p157
    %p159 = scmp.ne.s32.totalorder %s145, %s146
    %p160 = scmp.eq.s32.totalorder %s19, 1
    %p161 = por %p159, %p160
    %p163 = scmp.ne.s32.totalorder %s146, %s162
    %p164 = scmp.eq.s32.totalorder %s19, 0
    %p165 = por %p163, %p164
    %s166 = ssub.s32 %s20, %s32
    %s167 = ssub.s32 %s21, %s28
    %s168 = sor.u32 %s166, %s167
    %p169 = scmp.eq.s32.totalorder %s168, 0
    %s171 = sadd.s32 %s170, 1
    %s172 = scalar_select %p169, %s170, %s171
    %p175 = pneg %p169
    %p176 = scmp.eq.s32.totalorder %s13, 1
    %p177 = por %p175, %p176
    %p178 = scmp.ne.s32.totalorder %s170, %s173
    %p179 = scmp.eq.s32.totalorder %s13, 0
    %p180 = por %p178, %p179
    %p181 = scmp.ne.s32.totalorder %s170, %s173
    %p182 = scmp.eq.s32.totalorder %s18, 1
    %p183 = por %p181, %p182
    %p184 = scmp.ne.s32.totalorder %s173, %s174
    %p185 = scmp.eq.s32.totalorder %s18, 0
    %p186 = por %p184, %p185
    %p187 = scmp.ne.s32.totalorder %s173, %s174
    %p188 = scmp.eq.s32.totalorder %s19, 1
    %p189 = por %p187, %p188
    %p191 = scmp.ne.s32.totalorder %s174, %s190
    %p192 = scmp.eq.s32.totalorder %s19, 0
    %p193 = por %p191, %p192
    %s194 = ssub.s32 %s20, %s32
    %s195 = ssub.s32 %s21, %s28
    %s196 = sor.u32 %s194, %s195
    %p197 = scmp.eq.s32.totalorder %s196, 0
    %s199 = sadd.s32 %s198, 1
    %s200 = scalar_select %p197, %s198, %s199
    %p203 = pneg %p197
    %p204 = scmp.eq.s32.totalorder %s13, 1
    %p205 = por %p203, %p204
    %p206 = scmp.ne.s32.totalorder %s198, %s201
    %p207 = scmp.eq.s32.totalorder %s13, 0
    %p208 = por %p206, %p207
    %p209 = scmp.ne.s32.totalorder %s198, %s201
    %p210 = scmp.eq.s32.totalorder %s18, 1
    %p211 = por %p209, %p210
    %p212 = scmp.ne.s32.totalorder %s201, %s202
    %p213 = scmp.eq.s32.totalorder %s18, 0
    %p214 = por %p212, %p213
    %p215 = scmp.ne.s32.totalorder %s201, %s202
    %p216 = scmp.eq.s32.totalorder %s19, 1
    %p217 = por %p215, %p216
    %p219 = scmp.ne.s32.totalorder %s202, %s218
    %p220 = scmp.eq.s32.totalorder %s19, 0
    %p221 = por %p219, %p220
    %p222 = scmp.le.s32.totalorder 1, %s13
    %p223 = scmp.lt.s32.totalorder %s13, 3
    %p224 = pnand %p222, %p223
    %p225 = pneg %p224
    // Predicated region
    $region9: #{_ohem_forward.2} parent=5 // pred_check
      _
    $region10: #{_ohem_forward.2} parent=5 // pred_check_branch
      %227 = sbr.rel (%p224) target = $region12
    $region11: #{_ohem_forward.2} parent=5 // pred_region
      %s228 = ssub.s32 %s13, 1
      // Predicated region
      $region13: #{_ohem_forward.2} parent=11 // pred_check
        %p229 = pneg %p102
      $region14: #{_ohem_forward.2} parent=11 // pred_check_branch
        %231 = sbr.rel (%p229) target = $region16
      $region15: #{_ohem_forward.2} parent=11 // pred_region
        _
      $region16: #{_ohem_forward.2} parent=11 // pred_fallthru
        _
    $region12: #{_ohem_forward.2} parent=5 // pred_fallthru
      _
    %p232 = scmp.lt.s32.totalorder %s13, 2
    // Predicated region
    $region17: #{_ohem_forward.2} parent=5 // pred_check
      %p233 = pneg %p232
    $region18: #{_ohem_forward.2} parent=5 // pred_check_branch
      %235 = sbr.rel (%p233) target = $region20
    $region19: #{_ohem_forward.2} parent=5 // pred_region
      // Predicated region
      $region21: #{_ohem_forward.2} parent=19 // pred_check
        %p236 = pneg %p47
      $region22: #{_ohem_forward.2} parent=19 // pred_check_branch
        %238 = sbr.rel (%p236) target = $region24
      $region23: #{_ohem_forward.2} parent=19 // pred_region
        %s239 = smul.u32 2, %s21
        %p240 = scmp.lt.s32.totalorder %s20, 1
        %s241 = scalar_select %p240, %s20, 1
        %p242 = scmp.lt.s32.totalorder %s239, 1
        %s243 = scalar_select %p242, %s239, 1
        %s244 = smul.addr %s241, 8
        %s245 = sadd.s32 %s243, %s244
        %s246 = smul.addr %s245, 8
        %s247 = scalar_lea.vmem %s0, %s246
        %s248 = smul.u32 2, %s21
      $region24: #{_ohem_forward.2} parent=19 // pred_fallthru
        _
      // Predicated region
      $region25: #{_ohem_forward.2} parent=19 // pred_check
        %p249 = pneg %p75
      $region26: #{_ohem_forward.2} parent=19 // pred_check_branch
        %251 = sbr.rel (%p249) target = $region28
      $region27: #{_ohem_forward.2} parent=19 // pred_region
        %s252 = smul.u32 2, %s21
        %p253 = scmp.lt.s32.totalorder %s20, 1
        %s254 = scalar_select %p253, %s20, 1
        %p255 = scmp.lt.s32.totalorder %s252, 1
        %s256 = scalar_select %p255, %s252, 1
        %s257 = smul.addr %s254, 2
        %s258 = sadd.s32 %s256, %s257
        %s259 = smul.addr %s258, 8
        %s260 = scalar_lea.vmem %s1, %s259
        %s261 = smul.u32 2, %s21
      $region28: #{_ohem_forward.2} parent=19 // pred_fallthru
        _
    $region20: #{_ohem_forward.2} parent=5 // pred_fallthru
      _
    %p262 = scmp.le.s32.totalorder 1, %s13
    %p263 = scmp.lt.s32.totalorder %s13, 3
    %p264 = pnand %p262, %p263
    %p265 = pneg %p264
    // Predicated region
    $region29: #{_ohem_forward.2} parent=5 // pred_check
      _
    $region30: #{_ohem_forward.2} parent=5 // pred_check_branch
      %267 = sbr.rel (%p264) target = $region32
    $region31: #{_ohem_forward.2} parent=5 // pred_region
      %s268 = ssub.s32 %s13, 1
      %s269 = smul.u32 2, %s23
      %p270 = scmp.lt.s32.totalorder %s22, 1
      %s271 = scalar_select %p270, %s22, 1
      %p272 = scmp.lt.s32.totalorder %s269, 1
      %s273 = scalar_select %p272, %s269, 1
      %s274 = smul.addr %s271, 8
      %s275 = sadd.s32 %s273, %s274
      %s276 = smul.addr %s275, 8
      %s277 = scalar_lea.vmem %s0, %s276
      %p278 = pneg %p53
      %p279 = pneg %p50
      %s280 = smul.u32 2, %s23
      %p281 = scmp.lt.s32.totalorder %s22, 1
      %s282 = scalar_select %p281, %s22, 1
      %p283 = scmp.lt.s32.totalorder %s280, 1
      %s284 = scalar_select %p283, %s280, 1
      %s285 = smul.addr %s282, 2
      %s286 = sadd.s32 %s284, %s285
      %s287 = smul.addr %s286, 8
      %s288 = scalar_lea.vmem %s1, %s287
      %p289 = pneg %p81
      %p290 = pneg %p78
      %p291 = pneg %p102
      %p292 = pneg %p99
      %p293 = pneg %p130
      %p294 = pneg %p127
      %s295 = smul.u32 2, %s23
      %p296 = scmp.lt.s32.totalorder %s22, 1
      %s297 = scalar_select %p296, %s22, 1
      %p298 = scmp.lt.s32.totalorder %s295, 1
      %s299 = scalar_select %p298, %s295, 1
      %s300 = smul.addr %s297, 2
      %s301 = sadd.s32 %s299, %s300
      %s302 = smul.addr %s301, 8
      %s303 = scalar_lea.vmem %s3, %s302
      %p304 = pneg %p158
      %p305 = pneg %p155
      %s306 = smul.u32 2, %s23
      %p307 = scmp.lt.s32.totalorder %s22, 1
      %s308 = scalar_select %p307, %s22, 1
      %p309 = scmp.lt.s32.totalorder %s306, 1
      %s310 = scalar_select %p309, %s306, 1
      %s311 = smul.addr %s308, 2
      %s312 = sadd.s32 %s310, %s311
      %s313 = smul.addr %s312, 8
      %s314 = scalar_lea.vmem %s4, %s313
      %p315 = pneg %p186
      %p316 = pneg %p183
      %s317 = smul.u32 2, %s23
      %p318 = scmp.lt.s32.totalorder %s22, 1
      %s319 = scalar_select %p318, %s22, 1
      %p320 = scmp.lt.s32.totalorder %s317, 1
      %s321 = scalar_select %p320, %s317, 1
      %s322 = smul.addr %s319, 2
      %s323 = sadd.s32 %s321, %s322
      %s324 = smul.addr %s323, 8
      %s325 = scalar_lea.vmem %s5, %s324
      %p326 = pneg %p214
      %p327 = pneg %p211
      %s328 = smul.u32 2, %s23
      %p329 = scmp.lt.s32.totalorder %s22, 1
      %s330 = scalar_select %p329, %s22, 1
      %p331 = scmp.lt.s32.totalorder %s328, 1
      %s332 = scalar_select %p331, %s328, 1
      %s333 = smul.addr %s330, 8
      %s334 = sadd.s32 %s332, %s333
      %s335 = smul.addr %s334, 8
      %s336 = scalar_lea.vmem %s6, %s335
      %s337 = smul.u32 2, %s23
      %p338 = scmp.lt.s32.totalorder %s22, 1
      %s339 = scalar_select %p338, %s22, 1
      %p340 = scmp.lt.s32.totalorder %s337, 1
      %s341 = scalar_select %p340, %s337, 1
      %s342 = smul.addr %s339, 8
      %s343 = sadd.s32 %s341, %s342
      %s344 = smul.addr %s343, 8
      %s345 = scalar_lea.vmem %s0, %s344
      %s346 = smul.u32 2, %s23
      %s347 = smul.u32 2, %s23
      %p348 = scmp.lt.s32.totalorder %s22, 1
      %s349 = scalar_select %p348, %s22, 1
      %p350 = scmp.lt.s32.totalorder %s347, 1
      %s351 = scalar_select %p350, %s347, 1
      %s352 = smul.addr %s349, 2
      %s353 = sadd.s32 %s351, %s352
      %s354 = smul.addr %s353, 8
      %s355 = scalar_lea.vmem %s1, %s354
      %s356 = smul.u32 2, %s23
      %s357 = smul.u32 2, %s23
      %p358 = scmp.lt.s32.totalorder %s22, 1
      %s359 = scalar_select %p358, %s22, 1
      %p360 = scmp.lt.s32.totalorder %s357, 1
      %s361 = scalar_select %p360, %s357, 1
      %s362 = smul.addr %s359, 2
      %s363 = sadd.s32 %s361, %s362
      %s364 = smul.addr %s363, 8
      %s365 = scalar_lea.vmem %s3, %s364
      %s366 = smul.u32 2, %s23
      %s367 = smul.u32 2, %s23
      %p368 = scmp.lt.s32.totalorder %s22, 1
      %s369 = scalar_select %p368, %s22, 1
      %p370 = scmp.lt.s32.totalorder %s367, 1
      %s371 = scalar_select %p370, %s367, 1
      %s372 = smul.addr %s369, 2
      %s373 = sadd.s32 %s371, %s372
      %s374 = smul.addr %s373, 8
      %s375 = scalar_lea.vmem %s4, %s374
      %s376 = smul.u32 2, %s23
      %s377 = smul.u32 2, %s23
      %p378 = scmp.lt.s32.totalorder %s22, 1
      %s379 = scalar_select %p378, %s22, 1
      %p380 = scmp.lt.s32.totalorder %s377, 1
      %s381 = scalar_select %p380, %s377, 1
      %s382 = smul.addr %s379, 2
      %s383 = sadd.s32 %s381, %s382
      %s384 = smul.addr %s383, 8
      %s385 = scalar_lea.vmem %s5, %s384
      %s386 = smul.u32 2, %s23
      %s387 = smul.u32 2, %s23
      %p388 = scmp.lt.s32.totalorder %s22, 1
      %s389 = scalar_select %p388, %s22, 1
      %p390 = scmp.lt.s32.totalorder %s387, 1
      %s391 = scalar_select %p390, %s387, 1
      %s392 = smul.addr %s389, 8
      %s393 = sadd.s32 %s391, %s392
      %s394 = smul.addr %s393, 8
      %s395 = scalar_lea.vmem %s6, %s394
      %s396 = smul.u32 2, %s23
      %v397 = vld [vmem:[%s345] sm:$0xff]
      %v398 = vld [vmem:[%s345 + $0x8] sm:$0xff]
      %v399 = vld [vmem:[%s345 + $0x10] sm:$0xff]
      %v400 = vld [vmem:[%s345 + $0x18] sm:$0xff]
      %v401 = vld [vmem:[%s345 + $0x20] sm:$0xff]
      %v402 = vld [vmem:[%s345 + $0x28] sm:$0xff]
      %v403 = vld [vmem:[%s345 + $0x30] sm:$0xff]
      %v404 = vld [vmem:[%s345 + $0x38] sm:$0xff]
      %v405 = vld [vmem:[%s355] sm:$0xff]
      %v406 = vld [vmem:[%s355 + $0x8] sm:$0xff]
      %vm407 = vcmask 130048
      %v408 = vsel %vm407, %v397, -inf
      %v409 = vsel %vm407, %v399, -inf
      %v410 = vsel %vm407, %v401, -inf
      %v411 = vmax.f32 %v408, %v410
      %v412 = vsel %vm407, %v403, -inf
      %v413 = vmax.f32 %v409, %v412
      %v414 = vmax.f32 %v411, %v413
      %v415 = vsel %vm407, %v398, -inf
      %v416 = vsel %vm407, %v400, -inf
      %v417 = vsel %vm407, %v402, -inf
      %v418 = vmax.f32 %v415, %v417
      %v419 = vsel %vm407, %v404, -inf
      %v420 = vmax.f32 %v416, %v419
      %v421 = vmax.f32 %v418, %v420
      %v422 = vsub.f32 %v397, %v414
      %v423 = vsub.f32 %v398, %v421
      %v424 = vsub.f32 %v399, %v414
      %v425 = vsub.f32 %v400, %v421
      %v426 = vsub.f32 %v401, %v414
      %v427 = vsub.f32 %v402, %v421
      %v428 = vsub.f32 %v403, %v414
      %v429 = vsub.f32 %v404, %v421
      %v430 = vmul.f32 %v422, 1.442695
      %v431 = vpow.pop %v430
      %v432 = vmul.f32 %v423, 1.442695
      %v433 = vpow.pop %v432
      %v434 = vmul.f32 %v424, 1.442695
      %v435 = vpow.pop %v434
      %v436 = vmul.f32 %v425, 1.442695
      %v437 = vpow.pop %v436
      %v438 = vmul.f32 %v426, 1.442695
      %v439 = vpow.pop %v438
      %v440 = vmul.f32 %v427, 1.442695
      %v441 = vpow.pop %v440
      %v442 = vmul.f32 %v428, 1.442695
      %v443 = vpow.pop %v442
      %v444 = vmul.f32 %v429, 1.442695
      %v445 = vpow.pop %v444
      %v446 = vsel %vm407, %v431, 0.0
      %v447 = vsel %vm407, %v435, 0.0
      %v448 = vadd.f32 %v446, %v447
      %v449 = vsel %vm407, %v439, 0.0
      %v450 = vadd.f32 %v448, %v449
      %v451 = vsel %vm407, %v443, 0.0
      %v452 = vadd.f32 %v450, %v451
      %v453 = vsel %vm407, %v433, 0.0
      %v454 = vsel %vm407, %v437, 0.0
      %v455 = vadd.f32 %v453, %v454
      %v456 = vsel %vm407, %v441, 0.0
      %v457 = vadd.f32 %v455, %v456
      %v458 = vsel %vm407, %v445, 0.0
      %v459 = vadd.f32 %v457, %v458
      %v460 = vrcp.pop %v452
      %v461 = vmul.f32 1.0, %v460
      %v462 = vrcp.pop %v459
      %v463 = vmul.f32 1.0, %v462
      %v464 = vlog2.pop %v452
      %v465 = vmul.f32 %v464, 0.6931472
      %v466 = vlog2.pop %v459
      %v467 = vmul.f32 %v466, 0.6931472
      %v468 = vadd.f32 %v414, %v465
      %v469 = vadd.f32 %v421, %v467
      %vm470 = vcmp.eq.s32.totalorder %v405, 1
      %vm471 = vcmp.eq.s32.totalorder %v406, 1
      %v472 = vsel %vm470, %v399, %v397
      %v473 = vsel %vm471, %v400, %v398
      %vm474 = vcmp.eq.s32.totalorder %v405, 2
      %vm475 = vcmp.eq.s32.totalorder %v406, 2
      %v476 = vsel %vm474, %v401, %v472
      %v477 = vsel %vm475, %v402, %v473
      %vm478 = vcmp.eq.s32.totalorder %v405, 3
      %vm479 = vcmp.eq.s32.totalorder %v406, 3
      %v480 = vsel %vm478, %v403, %v476
      %v481 = vsel %vm479, %v404, %v477
      %v482 = vsub.f32 %v480, %v414
      %v483 = vsub.f32 %v481, %v421
      %v484 = vmul.f32 %v482, 1.442695
      %v485 = vpow.pop %v484
      %v486 = vmul.f32 %v483, 1.442695
      %v487 = vpow.pop %v486
      %v488 = vmul.f32 %v485, %v461
      %v489 = vmul.f32 %v487, %v463
      %vm490 = vcmp.ge.s32.totalorder %v405, 0
      %vm491 = vcmp.ge.s32.totalorder %v406, 0
      %v492 = vsel %vm490, 1, 0
      %v493 = vsel %vm491, 1, 0
      %v494 = vcvt.s32.f32 %v492
      %v495 = vcvt.s32.f32 %v493
      %496 = vst.msk [vmem:[%s365] sm:$0xff] %vm407, %v488
      %497 = vst.msk [vmem:[%s365 + $0x8] sm:$0xff] %vm407, %v489
      %v498 = vsub.f32 %v468, %v480
      %v499 = vsub.f32 %v469, %v481
      %v500 = vmul.f32 %v498, %v494
      %v501 = vmul.f32 %v499, %v495
      %502 = vst.msk [vmem:[%s375] sm:$0xff] %vm407, %v500
      %503 = vst.msk [vmem:[%s375 + $0x8] sm:$0xff] %vm407, %v501
      %v504 = vsub.f32 %v468, %v397
      %v505 = vsub.f32 %v469, %v398
      %v506 = vmul.f32 %v504, %v494
      %v507 = vmul.f32 %v505, %v495
      %508 = vst.msk [vmem:[%s385] sm:$0xff] %vm407, %v506
      %509 = vst.msk [vmem:[%s385 + $0x8] sm:$0xff] %vm407, %v507
      %v510 = vmul.f32 %v431, %v461
      %v511 = vmul.f32 %v433, %v463
      %v512 = vmul.f32 %v435, %v461
      %v513 = vmul.f32 %v437, %v463
      %v514 = vmul.f32 %v439, %v461
      %v515 = vmul.f32 %v441, %v463
      %v516 = vmul.f32 %v443, %v461
      %v517 = vmul.f32 %v445, %v463
      %v518 = vld [vmem:[%s2] sm:$0xff]
      %v519 = vld [vmem:[%s2 + $0x8] sm:$0xff]
      %v521 = vsel %vm407, %v510, 0
      %v524 = vsel %vm407, %v511, 0
      %v527 = vsel %vm407, %v512, 0
      %v530 = vsel %vm407, %v513, 0
      %v533 = vsel %vm407, %v514, 0
      %v536 = vsel %vm407, %v515, 0
      %v539 = vsel %vm407, %v516, 0
      %v542 = vsel %vm407, %v517, 0
      %544 = vmatprep.subr.mxu0 0.0
      %545 = vmatpush1.msra.mxu0 %v518
      %546 = vmatprep.subr.mxu0 0.0
      %547 = vmatpush1.msra.mxu0 %v519
      %548 = vmatprep.subr.mxu0 0.0
      %549 = vmatpush1.msra.mxu0 0.0
      %550 = vmatprep.subr.mxu0 0.0
      %551 = vmatpush1.msra.mxu0 0.0
      %552 = vmatprep.subr.mxu0 0.0
      %553 = vmatpush1.msra.mxu0 0.0
      %554 = vmatprep.subr.mxu0 0.0
      %555 = vmatpush1.msra.mxu0 0.0
      %556 = vmatprep.subr.mxu0 0.0
      %557 = vmatpush1.msra.mxu0 0.0
      %558 = vmatprep.subr.mxu0 0.0
      %559 = vmatpush1.msra.mxu0 0.0
      %560 = vmatprep.subr.mxu0 0.0
      %561 = vmatpush1.msra.mxu0 0.0
      %562 = vmatprep.subr.mxu0 0.0
      %563 = vmatpush1.msra.mxu0 0.0
      %564 = vmatprep.subr.mxu0 0.0
      %565 = vmatpush1.msra.mxu0 0.0
      %566 = vmatprep.subr.mxu0 0.0
      %567 = vmatpush1.msra.mxu0 0.0
      %568 = vmatprep.subr.mxu0 0.0
      %569 = vmatpush1.msra.mxu0 0.0
      %570 = vmatprep.subr.mxu0 0.0
      %571 = vmatpush1.msra.mxu0 0.0
      %572 = vmatprep.subr.mxu0 0.0
      %573 = vmatpush1.msra.mxu0 0.0
      %574 = vmatprep.subr.mxu0 0.0
      %575 = vmatpush1.msra.mxu0 0.0
      %576 = vmatprep.subr.mxu0 0.0
      %577 = vmatpush1.msra.mxu0 0.0
      %578 = vmatprep.subr.mxu0 0.0
      %579 = vmatpush1.msra.mxu0 0.0
      %580 = vmatprep.subr.mxu0 0.0
      %581 = vmatpush1.msra.mxu0 0.0
      %582 = vmatprep.subr.mxu0 0.0
      %583 = vmatpush1.msra.mxu0 0.0
      %584 = vmatprep.subr.mxu0 0.0
      %585 = vmatpush1.msra.mxu0 0.0
      %586 = vmatprep.subr.mxu0 0.0
      %587 = vmatpush1.msra.mxu0 0.0
      %588 = vmatprep.subr.mxu0 0.0
      %589 = vmatpush1.msra.mxu0 0.0
      %590 = vmatprep.subr.mxu0 0.0
      %591 = vmatpush1.msra.mxu0 0.0
      %592 = vmatprep.subr.mxu0 0.0
      %593 = vmatpush1.msra.mxu0 0.0
      %594 = vmatprep.subr.mxu0 0.0
      %595 = vmatpush1.msra.mxu0 0.0
      %596 = vmatprep.subr.mxu0 0.0
      %597 = vmatpush1.msra.mxu0 0.0
      %598 = vmatprep.subr.mxu0 0.0
      %599 = vmatpush1.msra.mxu0 0.0
      %600 = vmatprep.subr.mxu0 0.0
      %601 = vmatpush1.msra.mxu0 0.0
      %602 = vmatprep.subr.mxu0 0.0
      %603 = vmatpush1.msra.mxu0 0.0
      %604 = vmatprep.subr.mxu0 0.0
      %605 = vmatpush1.msra.mxu0 0.0
      %606 = vmatprep.subr.mxu0 0.0
      %607 = vmatpush1.msra.mxu0 0.0
      %608 = vmatprep.mubr.f32.mxu0 0.0
      %609 = vmatmul.mubr.f32.gmra.mrb[0].mxu0 %v521
      %v610 = vpop.f32.mrb[0].mxu0
      %v611 = vadd.f32 0.0, %v610
      %v612 = vpop.f32.mrb[0].mxu0
      %613 = vmatprep.mubr.f32.mxu0 0.0
      %614 = vmatmul.mubr.f32.gmra.mrb[0].mxu0 %v524
      %v615 = vpop.f32.mrb[0].mxu0
      %v616 = vadd.f32 0.0, %v615
      %v617 = vpop.f32.mrb[0].mxu0
      %618 = vmatprep.mubr.f32.mxu0 0.0
      %619 = vmatmul.mubr.f32.gmra.mrb[0].mxu0 %v527
      %v620 = vpop.f32.mrb[0].mxu0
      %v621 = vadd.f32 0.0, %v620
      %v622 = vpop.f32.mrb[0].mxu0
      %623 = vmatprep.mubr.f32.mxu0 0.0
      %624 = vmatmul.mubr.f32.gmra.mrb[0].mxu0 %v530
      %v625 = vpop.f32.mrb[0].mxu0
      %v626 = vadd.f32 0.0, %v625
      %v627 = vpop.f32.mrb[0].mxu0
      %628 = vmatprep.mubr.f32.mxu0 0.0
      %629 = vmatmul.mubr.f32.gmra.mrb[0].mxu0 %v533
      %v630 = vpop.f32.mrb[0].mxu0
      %v631 = vadd.f32 0.0, %v630
      %v632 = vpop.f32.mrb[0].mxu0
      %633 = vmatprep.mubr.f32.mxu0 0.0
      %634 = vmatmul.mubr.f32.gmra.mrb[0].mxu0 %v536
      %v635 = vpop.f32.mrb[0].mxu0
      %v636 = vadd.f32 0.0, %v635
      %v637 = vpop.f32.mrb[0].mxu0
      %638 = vmatprep.mubr.f32.mxu0 0.0
      %639 = vmatmul.mubr.f32.gmra.mrb[0].mxu0 %v539
      %v640 = vpop.f32.mrb[0].mxu0
      %v641 = vadd.f32 0.0, %v640
      %v642 = vpop.f32.mrb[0].mxu0
      %643 = vmatprep.mubr.f32.mxu0 0.0
      %644 = vmatmul.mubr.f32.gmra.mrb[0].mxu0 %v542
      %v645 = vpop.f32.mrb[0].mxu0
      %v646 = vadd.f32 0.0, %v645
      %v647 = vpop.f32.mrb[0].mxu0
      %648 = vdwg.mxu0
      %649 = vst [vmem:[%s395] sm:$0xff] %v611
      %650 = vst [vmem:[%s395 + $0x8] sm:$0xff] %v616
      %651 = vst [vmem:[%s395 + $0x10] sm:$0xff] %v621
      %652 = vst [vmem:[%s395 + $0x18] sm:$0xff] %v626
      %653 = vst [vmem:[%s395 + $0x20] sm:$0xff] %v631
      %654 = vst [vmem:[%s395 + $0x28] sm:$0xff] %v636
      %655 = vst [vmem:[%s395 + $0x30] sm:$0xff] %v641
      %656 = vst [vmem:[%s395 + $0x38] sm:$0xff] %v646
      %s657 = smul.u32 2, %s23
      %p658 = scmp.lt.s32.totalorder %s22, 1
      %s659 = scalar_select %p658, %s22, 1
      %p660 = scmp.lt.s32.totalorder %s657, 1
      %s661 = scalar_select %p660, %s657, 1
      %s662 = smul.addr %s659, 2
      %s663 = sadd.s32 %s661, %s662
      %s664 = smul.addr %s663, 8
      %s665 = scalar_lea.vmem %s3, %s664
      %s666 = smul.u32 2, %s23
      %p667 = scmp.lt.s32.totalorder %s22, 1
      %s668 = scalar_select %p667, %s22, 1
      %p669 = scmp.lt.s32.totalorder %s666, 1
      %s670 = scalar_select %p669, %s666, 1
      %s671 = smul.addr %s668, 2
      %s672 = sadd.s32 %s670, %s671
      %s673 = smul.addr %s672, 8
      %s674 = scalar_lea.vmem %s4, %s673
      %s675 = smul.u32 2, %s23
      %p676 = scmp.lt.s32.totalorder %s22, 1
      %s677 = scalar_select %p676, %s22, 1
      %p678 = scmp.lt.s32.totalorder %s675, 1
      %s679 = scalar_select %p678, %s675, 1
      %s680 = smul.addr %s677, 2
      %s681 = sadd.s32 %s679, %s680
      %s682 = smul.addr %s681, 8
      %s683 = scalar_lea.vmem %s5, %s682
      %s684 = smul.u32 2, %s23
      %p685 = scmp.lt.s32.totalorder %s22, 1
      %s686 = scalar_select %p685, %s22, 1
      %p687 = scmp.lt.s32.totalorder %s684, 1
      %s688 = scalar_select %p687, %s684, 1
      %s689 = smul.addr %s686, 8
      %s690 = sadd.s32 %s688, %s689
      %s691 = smul.addr %s690, 8
      %s692 = scalar_lea.vmem %s6, %s691
      // Predicated region
      $region33: #{_ohem_forward.2} parent=31 // pred_check
        %p693 = pneg %p127
      $region34: #{_ohem_forward.2} parent=31 // pred_check_branch
        %695 = sbr.rel (%p693) target = $region36
      $region35: #{_ohem_forward.2} parent=31 // pred_region
        %s696 = smul.u32 2, %s23
      $region36: #{_ohem_forward.2} parent=31 // pred_fallthru
        _
      // Predicated region
      $region37: #{_ohem_forward.2} parent=31 // pred_check
        %p697 = pneg %p155
      $region38: #{_ohem_forward.2} parent=31 // pred_check_branch
        %699 = sbr.rel (%p697) target = $region40
      $region39: #{_ohem_forward.2} parent=31 // pred_region
        %s700 = smul.u32 2, %s23
      $region40: #{_ohem_forward.2} parent=31 // pred_fallthru
        _
      // Predicated region
      $region41: #{_ohem_forward.2} parent=31 // pred_check
        %p701 = pneg %p183
      $region42: #{_ohem_forward.2} parent=31 // pred_check_branch
        %703 = sbr.rel (%p701) target = $region44
      $region43: #{_ohem_forward.2} parent=31 // pred_region
        %s704 = smul.u32 2, %s23
      $region44: #{_ohem_forward.2} parent=31 // pred_fallthru
        _
      // Predicated region
      $region45: #{_ohem_forward.2} parent=31 // pred_check
        %p705 = pneg %p211
      $region46: #{_ohem_forward.2} parent=31 // pred_check_branch
        %707 = sbr.rel (%p705) target = $region48
      $region47: #{_ohem_forward.2} parent=31 // pred_region
        %s708 = smul.u32 2, %s23
      $region48: #{_ohem_forward.2} parent=31 // pred_fallthru
        _
    $region32: #{_ohem_forward.2} parent=5 // pred_fallthru
      _
    %p709 = scmp.le.s32.totalorder 2, %s13
    // Predicated region
    $region49: #{_ohem_forward.2} parent=5 // pred_check
      %p710 = pneg %p709
    $region50: #{_ohem_forward.2} parent=5 // pred_check_branch
      %712 = sbr.rel (%p710) target = $region52
    $region51: #{_ohem_forward.2} parent=5 // pred_region
      %s713 = ssub.s32 %s13, 2
      // Predicated region
      $region53: #{_ohem_forward.2} parent=51 // pred_check
        %p714 = pneg %p133
      $region54: #{_ohem_forward.2} parent=51 // pred_check_branch
        %716 = sbr.rel (%p714) target = $region56
      $region55: #{_ohem_forward.2} parent=51 // pred_region
        %s717 = smul.u32 2, %s25
        %p718 = scmp.lt.s32.totalorder %s24, 1
        %s719 = scalar_select %p718, %s24, 1
        %p720 = scmp.lt.s32.totalorder %s717, 1
        %s721 = scalar_select %p720, %s717, 1
        %s722 = smul.addr %s719, 2
        %s723 = sadd.s32 %s721, %s722
        %s724 = smul.addr %s723, 8
        %s725 = scalar_lea.vmem %s3, %s724
      $region56: #{_ohem_forward.2} parent=51 // pred_fallthru
        _
      // Predicated region
      $region57: #{_ohem_forward.2} parent=51 // pred_check
        %p726 = pneg %p161
      $region58: #{_ohem_forward.2} parent=51 // pred_check_branch
        %728 = sbr.rel (%p726) target = $region60
      $region59: #{_ohem_forward.2} parent=51 // pred_region
        %s729 = smul.u32 2, %s25
        %p730 = scmp.lt.s32.totalorder %s24, 1
        %s731 = scalar_select %p730, %s24, 1
        %p732 = scmp.lt.s32.totalorder %s729, 1
        %s733 = scalar_select %p732, %s729, 1
        %s734 = smul.addr %s731, 2
        %s735 = sadd.s32 %s733, %s734
        %s736 = smul.addr %s735, 8
        %s737 = scalar_lea.vmem %s4, %s736
      $region60: #{_ohem_forward.2} parent=51 // pred_fallthru
        _
      // Predicated region
      $region61: #{_ohem_forward.2} parent=51 // pred_check
        %p738 = pneg %p189
      $region62: #{_ohem_forward.2} parent=51 // pred_check_branch
        %740 = sbr.rel (%p738) target = $region64
      $region63: #{_ohem_forward.2} parent=51 // pred_region
        %s741 = smul.u32 2, %s25
        %p742 = scmp.lt.s32.totalorder %s24, 1
        %s743 = scalar_select %p742, %s24, 1
        %p744 = scmp.lt.s32.totalorder %s741, 1
        %s745 = scalar_select %p744, %s741, 1
        %s746 = smul.addr %s743, 2
        %s747 = sadd.s32 %s745, %s746
        %s748 = smul.addr %s747, 8
        %s749 = scalar_lea.vmem %s5, %s748
      $region64: #{_ohem_forward.2} parent=51 // pred_fallthru
        _
      // Predicated region
      $region65: #{_ohem_forward.2} parent=51 // pred_check
        %p750 = pneg %p217
      $region66: #{_ohem_forward.2} parent=51 // pred_check_branch
        %752 = sbr.rel (%p750) target = $region68
      $region67: #{_ohem_forward.2} parent=51 // pred_region
        %s753 = smul.u32 2, %s25
        %p754 = scmp.lt.s32.totalorder %s24, 1
        %s755 = scalar_select %p754, %s24, 1
        %p756 = scmp.lt.s32.totalorder %s753, 1
        %s757 = scalar_select %p756, %s753, 1
        %s758 = smul.addr %s755, 8
        %s759 = sadd.s32 %s757, %s758
        %s760 = smul.addr %s759, 8
        %s761 = scalar_lea.vmem %s6, %s760
      $region68: #{_ohem_forward.2} parent=51 // pred_fallthru
        _
    $region52: #{_ohem_forward.2} parent=5 // pred_fallthru
      _
  $region6: #{_ohem_forward.2} parent=0 // loop_footer
    %s17 = sadd.s32 1, %s13
  $region7: #{_ohem_forward.2} parent=0 // loop_footer_branch
    %12 = sbr.rel target = $region3
  $region8: #{_ohem_forward.2} parent=0 // loop_exit
    _

</llo_original>
